<compile_context>
chip_gen: v6e
topology: v6e:2x2x1
jax: 0.10.0
libtpu: 0.0.40
codegen_flags: <defaults>
</compile_context>

<pallas_src>
import numpy as np
import jax
import jax.numpy as jnp
from jax.experimental import pallas as pl
from jax.experimental.pallas import tpu as pltpu


def _vmem_capacity_bytes():
    try:
        return int(pltpu.get_tpu_info().vmem_capacity_bytes)
    except Exception:
        return 64 * 1024 * 1024  # conservative (v7x per-TC physical VMEM)


def _flat_dims(x):
    n = x.shape[0]
    d = int(np.prod(x.shape[1:])) if x.ndim > 1 else 1
    return n, d


# ---------------------------------------------------------------------------
# Path 0: zero-copy.  For a contiguous input, torch's .view(N, -1) is pure
# metadata; XLA lowers this reshape to a bitcast — no kernel, no HBM traffic.
# Use this whenever a fresh buffer is not explicitly required.
# ---------------------------------------------------------------------------
def flatten_zero_copy(x):
    n, d = _flat_dims(x)
    return jnp.reshape(x, (n, d))


# ---------------------------------------------------------------------------
# Path A (default Pallas kernel): HBM -> HBM DMA into a fresh buffer.
# Bandwidth-optimal for a materializing flatten: N*D bytes read + N*D written,
# no VMEM round trip.  Grid=(num_shards,) "parallel" lets v7x drive one DMA
# stream per TensorCore; each shard issues num_chunks concurrent descriptors
# (started together, then waited) to hide per-DMA issue/ramp latency.
# ---------------------------------------------------------------------------
def _make_dma_flatten_kernel(rows_per_shard, num_chunks):
    chunk_rows = rows_per_shard // num_chunks

    def kernel(x_hbm, o_hbm, sem):
        shard = pl.program_id(0)
        base = shard * rows_per_shard
        copies = []
        for c in range(num_chunks):  # static unroll
            start = base + c * chunk_rows
            cp = pltpu.make_async_copy(
                x_hbm.at[pl.ds(start, chunk_rows), :],
                o_hbm.at[pl.ds(start, chunk_rows), :],
                sem.at[c],
            )
            cp.start()
            copies.append(cp)
        for cp in copies:
            cp.wait()

    return kernel


def flatten(x, *, max_chunks_per_shard=4, min_chunk_bytes=4 * 1024 * 1024):
    """Pallas equivalent of torch Flatten: (N, ...) -> (N, prod(...))."""
    n, d = _flat_dims(x)
    # Row-major collapse of trailing dims (metadata-only for contiguous x),
    # matching torch's contiguous .view(N, -1).
    x2 = x.reshape(n, d)
    itemsize = jnp.dtype(x.dtype).itemsize

    # Shard rows across TensorCores (2 on v7x); static equal shard sizes only.
    num_shards = 2 if (n >= 2 and n % 2 == 0) else 1
    rows_per_shard = n // num_shards

    # Split each shard's copy into concurrent DMA descriptors only if the
    # chunks stay contiguous and multi-MiB (never slower in that regime).
    row_bytes = d * itemsize
    num_chunks = 1
    for k in (max_chunks_per_shard, 4, 2):
        if (k > 1 and rows_per_shard % k == 0
                and (rows_per_shard // k) * row_bytes >= min_chunk_bytes):
            num_chunks = k
            break

    kernel = _make_dma_flatten_kernel(rows_per_shard, num_chunks)

    # NOTE: input_output_aliases={0: 0} would make this a donated no-op, but
    # then the DMA would be a self-copy and callers lose x; for the true
    # zero-copy path use flatten_zero_copy() instead.
    return pl.pallas_call(
        kernel,
        out_shape=jax.ShapeDtypeStruct((n, d), x.dtype),
        grid=(num_shards,),
        in_specs=[pl.BlockSpec(memory_space=pl.ANY)],
        out_specs=pl.BlockSpec(memory_space=pl.ANY),
        scratch_shapes=[pltpu.SemaphoreType.DMA((num_chunks,))],
        compiler_params=pltpu.CompilerParams(
            dimension_semantics=("parallel",),
        ),
        cost_estimate=pl.CostEstimate(
            flops=0, transcendentals=0,
            bytes_accessed=2 * n * d * itemsize),
    )(x2)


# ---------------------------------------------------------------------------
# Path B (alternative): tiled identity copy through VMEM.  Only worth using
# when fusing compute into the copy; kept correct + bounded:
#   * tiles capped by a byte budget derived from physical VMEM (4 MiB on
#     64 MiB v7x, 8 MiB on 128 MiB v5e/v6e), never a whole-array fallback,
#   * pl.cdiv grid so unaligned n / d just get masked edge blocks,
#   * default double buffering (no extra pipeline depth — nothing to hide).
# ---------------------------------------------------------------------------
def _flatten_copy_kernel(x_ref, o_ref):
    o_ref[...] = x_ref[...]


def _sublane_multiple(dtype):
    itemsize = jnp.dtype(dtype).itemsize
    return max(8, 32 // itemsize)  # 8 for f32, 16 for bf16, 32 for int8/fp8


def flatten_tiled(x, *, target_tile_bytes=None):
    n, d = _flat_dims(x)
    x2 = x.reshape(n, d)

    itemsize = jnp.dtype(x.dtype).itemsize
    sub = _sublane_multiple(x.dtype)

    vmem_cap = _vmem_capacity_bytes()
    if target_tile_bytes is None:
        target_tile_bytes = (8 * 1024 * 1024 if vmem_cap >= 96 * 1024 * 1024
                             else 4 * 1024 * 1024)

    # Lane (last) dim: as wide as possible; full row if it fits the budget,
    # otherwise a 128-multiple so the bulk of the stores are unmasked vst.
    max_lanes = max(128, target_tile_bytes // (sub * itemsize))
    tn = d if d <= max_lanes else (max_lanes // 128) * 128

    # Sublane (batch) dim: full batch if it fits, otherwise a multiple of the
    # dtype's sublane packing capped by the byte budget.  Ragged edges from
    # the cdiv grid are handled by Pallas — no whole-array blow-up path.
    max_rows = max(sub, target_tile_bytes // (tn * itemsize))
    tm = n if n <= max_rows else (max_rows // sub) * sub

    grid = (pl.cdiv(n, tm), pl.cdiv(d, tn))
    tile_bytes = tm * tn * itemsize
    # 2 double-buffered input + 2 output blocks ~= 4 * tile_bytes; keep
    # headroom and never exceed ~50% of this part's physical VMEM.
    vmem_limit = int(min(vmem_cap // 2, max(16 * 1024 * 1024, 6 * tile_bytes)))

    return pl.pallas_call(
        _flatten_copy_kernel,
        out_shape=jax.ShapeDtypeStruct((n, d), x.dtype),
        grid=grid,
        in_specs=[pl.BlockSpec((tm, tn), lambda i, j: (i, j))],
        out_specs=pl.BlockSpec((tm, tn), lambda i, j: (i, j)),
        compiler_params=pltpu.CompilerParams(
            dimension_semantics=("parallel", "parallel"),
            vmem_limit_bytes=vmem_limit,
        ),
        cost_estimate=pl.CostEstimate(
            flops=0, transcendentals=0,
            bytes_accessed=2 * n * d * itemsize),
    )(x2)


if __name__ == "__main__":
    key = jax.random.PRNGKey(0)
    # Small NCHW input consistent with the module's forward.
    x = jax.random.normal(key, (2, 4, 16, 16), dtype=jnp.float32)

    # Reference semantics of torch .view(N, -1) on a contiguous tensor.
    ref = jnp.reshape(x, (x.shape[0], -1))

    # Default path: sharded / chunked HBM->HBM DMA kernel.
    out = flatten(x)
    jax.block_until_ready(out)
    assert out.shape == (2, 4 * 16 * 16), out.shape
    assert out.dtype == x.dtype
    np.testing.assert_array_equal(np.asarray(out), np.asarray(ref))

    # Alternative path: capped lane/sublane-dense tiled copy.
    out_t = flatten_tiled(x)
    jax.block_until_ready(out_t)
    np.testing.assert_array_equal(np.asarray(out_t), np.asarray(ref))

    # Recommended production path: zero-copy metadata reshape.
    out_z = flatten_zero_copy(x)
    jax.block_until_ready(out_z)
    np.testing.assert_array_equal(np.asarray(out_z), np.asarray(ref))

    print("KERNEL_OK")
</pallas_src>

<mosaic_0001>
module attributes {stable_mosaic.version = 11 : i64} {
  func.func @kernel(%arg0: i32, %arg1: memref<2x1024xf32, #tpu.memory_space<any>>, %arg2: memref<2x1024xf32, #tpu.memory_space<any>>, %arg3: memref<1x!tpu.dma_semaphore, #tpu.memory_space<semaphore_mem>>) attributes {dimension_semantics = [#tpu.dimension_semantics<parallel>], iteration_bounds = array<i64: 2>, scalar_prefetch = 0 : i64, scratch_operands = 1 : i64, tpu.core_type = #tpu.core_type<tc>, window_params = [{}, {}]} {
    %c1_i32 = arith.constant 1 : i32
    %0 = arith.muli %arg0, %c1_i32 : i32
    %c0_i32 = arith.constant 0 : i32
    %1 = arith.addi %0, %c0_i32 : i32
    %c0_i32_0 = arith.constant 0 : i32
    %c0_i32_1 = arith.constant 0 : i32
    %2 = tpu.memref_slice %arg1[%1, %c0_i32_1] : memref<2x1024xf32, #tpu.memory_space<any>> -> memref<1x1024xf32, #tpu.memory_space<any>>
    %c0_i32_2 = arith.constant 0 : i32
    %3 = tpu.memref_slice %arg2[%1, %c0_i32_2] : memref<2x1024xf32, #tpu.memory_space<any>> -> memref<1x1024xf32, #tpu.memory_space<any>>
    %4 = tpu.memref_slice %arg3[%c0_i32_0] : memref<1x!tpu.dma_semaphore, #tpu.memory_space<semaphore_mem>> -> memref<1x!tpu.dma_semaphore, #tpu.memory_space<semaphore_mem>>
    %5 = tpu.memref_squeeze %4 : memref<1x!tpu.dma_semaphore, #tpu.memory_space<semaphore_mem>> -> memref<!tpu.dma_semaphore, #tpu.memory_space<semaphore_mem>>
    tpu.enqueue_dma source(%2 : memref<1x1024xf32, #tpu.memory_space<any>>) target(%3 : memref<1x1024xf32, #tpu.memory_space<any>>) target_semaphore(%5 : memref<!tpu.dma_semaphore, #tpu.memory_space<semaphore_mem>>)
    %c0_i32_3 = arith.constant 0 : i32
    %c0_i32_4 = arith.constant 0 : i32
    %6 = tpu.memref_slice %arg1[%1, %c0_i32_4] : memref<2x1024xf32, #tpu.memory_space<any>> -> memref<1x1024xf32, #tpu.memory_space<any>>
    %c0_i32_5 = arith.constant 0 : i32
    %7 = tpu.memref_slice %arg2[%1, %c0_i32_5] : memref<2x1024xf32, #tpu.memory_space<any>> -> memref<1x1024xf32, #tpu.memory_space<any>>
    %8 = tpu.memref_slice %arg3[%c0_i32_3] : memref<1x!tpu.dma_semaphore, #tpu.memory_space<semaphore_mem>> -> memref<1x!tpu.dma_semaphore, #tpu.memory_space<semaphore_mem>>
    %9 = tpu.memref_squeeze %8 : memref<1x!tpu.dma_semaphore, #tpu.memory_space<semaphore_mem>> -> memref<!tpu.dma_semaphore, #tpu.memory_space<semaphore_mem>>
    tpu.wait_dma2 semaphore(%9 : memref<!tpu.dma_semaphore, #tpu.memory_space<semaphore_mem>>) src(%6 : memref<1x1024xf32, #tpu.memory_space<any>>) dst(%7 : memref<1x1024xf32, #tpu.memory_space<any>>)
    return
  }
}

</mosaic_0001>

<llo_original>
// kernel: tpu_custom_call.1
$region0: #{tpu_custom_call.1}
  #allocation0 [shape = 'u32[]', space=smem, size = 0x4, offset = 0x4, fixed_abs, tag = 'smem constant byte address 0x4 - core index']
  #allocation1 [shape = 'u32[144,128]{1,0:T(1,128)}', space=vmem, size = 0x12000, scoped, tag = 'internal scratch']
  #allocation2 [shape = 's32[1]{0}', space=sflag, size = 0x4, scoped, tag = 'scratch operand']
  #allocation3 [shape = 's32[]', space=sflag, size = 0x4, offset = 0, fixed_abs, tag = 'sflag constant byte address 0x0 - dummy sync flag']
  %s0 = inlined_call_operand.hbm [shape: f32[2,1024], index: 0, kind: input, shape index: {}]
  %s1 = inlined_call_operand.hbm [shape: f32[2,1024], index: 1, kind: output, shape index: {}]
  %s2 = sld [smem:[#allocation0]]
  $region9: #{tpu_custom_call.1} parent=0
    _
  %s4 = ssub.s32 1, %s2
  %s5 = scalar_select 0, %s4, %s2
  loop: start=0, step=1, limit=2
  $region2: #{tpu_custom_call.1} parent=0 // loop_pre_header
    _
  $region3: #{tpu_custom_call.1} parent=0 // loop_header
    %s7 = sphi 0, %s11
    %p8 = scmp.ge.s32.totalorder %s7, 2
  $region4: #{tpu_custom_call.1} parent=0 // loop_header_branch
    %10 = sbr.rel (%p8) target = $region8
  $region5: #{tpu_custom_call.1} parent=0 // loop_body
    #allocation4 [shape = 'u32[3]{0}', space=smem, size = 0xc, scoped, tag = 'DMA stride descriptor']
    %s12 = sadd.s32 %s7, 1
    %s13 = sshrl.u32 %s7, 1
    %s14 = sand.u32 %s7, 1
    %s15 = smul.u32 %s13, 16
    %s16 = sadd.s32 %s14, %s15
    %s17 = smul.addr %s16, 16
    %s18 = scalar_lea.hbm %s0, %s17
    %s19 = smul.addr %s16, 16
    %s20 = scalar_lea.hbm %s1, %s19
    %s22 = sshll.u32 1, 14
    %s23 = sxor.u32 4294967295, %s22
    %27 = sst [smem:[#allocation4]] 32
    %s28 = scalar_lea.smem [#allocation4], 1
    %29 = sst [smem:[%s28]] 32
    %s30 = scalar_lea.smem [#allocation4], 2
    %31 = sst [smem:[%s30]] 1
    %33 = dma.general %s18, 128, %s20, [#allocation2], 131072, [#allocation4], 0, 0
    %s34 = smul.u32 1, 8
    %s35 = sshll.u32 %s34, 4
    %36 = dma.done [#allocation2], %s35
  $region6: #{tpu_custom_call.1} parent=0 // loop_footer
    %s11 = sadd.s32 1, %s7
  $region7: #{tpu_custom_call.1} parent=0 // loop_footer_branch
    %6 = sbr.rel target = $region3
  $region8: #{tpu_custom_call.1} parent=0 // loop_exit
    _
  %37 = vsyncmov [#allocation2]
  %s38 = vpop.sfrf %37
  %p39 = scmp.eq.s32.totalorder %s38, 0
  %p40 = pneg %p39
  %42 = shalt.err (%p40)

</llo_original>
